<compile_context>
chip_gen: v5e
topology: v5e:2x2
jax: 0.10.0
libtpu: 0.0.40
codegen_flags: <defaults>
</compile_context>

<pallas_src>
import jax
import jax.numpy as jnp
from jax.experimental import pallas as pl
from jax.experimental.pallas import tpu as pltpu


def _identity_copy_kernel(x_ref, o_ref):
    o_ref[...] = x_ref[...]


def _resolve_shape(target_shape, total):
    """torch.view-style shape resolution (supports a single -1)."""
    target_shape = tuple(int(s) for s in target_shape)
    if -1 in target_shape:
        idx = target_shape.index(-1)
        known = 1
        for i, s in enumerate(target_shape):
            if i != idx:
                known *= s
        assert known > 0 and total % known == 0, "invalid shape for view"
        target_shape = target_shape[:idx] + (total // known,) + target_shape[idx + 1:]
    prod = 1
    for s in target_shape:
        prod *= s
    assert prod == total, "shape is invalid for input size"
    return target_shape


# Per-block byte budget and explicit scoped-VMEM limit (see header comment).
_TARGET_BLOCK_BYTES = 4 * 1024 * 1024
_VMEM_LIMIT_BYTES = 48 * 1024 * 1024


def _flat_copy(flat):
    """Identity copy of a 1-D array through VMEM with large lane-dense tiles."""
    total = flat.shape[0]
    dtype = flat.dtype
    itemsize = jnp.dtype(dtype).itemsize
    # dtype-aware minimum sublane multiple: 8 (f32) / 16 (bf16) / 32 (i8/fp8)
    sub_mult = max(8, 32 // itemsize)

    # Widest lane width (multiple of 128) that divides the flat size.
    lane = next((c for c in (1024, 512, 256, 128) if total % c == 0), None)

    if lane is not None:
        rows = total // lane
        x2d = flat.reshape(rows, lane)
        if rows <= sub_mult:
            # Full-extent sublane dim (always a legal block shape).
            block_rows = rows
        else:
            max_rows = max(
                sub_mult,
                (_TARGET_BLOCK_BYTES // (lane * itemsize)) // sub_mult * sub_mult,
            )
            block_rows = min(max_rows, (rows // sub_mult) * sub_mult)
        grid = (pl.cdiv(rows, block_rows),)
        out2d = pl.pallas_call(
            _identity_copy_kernel,
            out_shape=jax.ShapeDtypeStruct((rows, lane), dtype),
            grid=grid,
            in_specs=[pl.BlockSpec((block_rows, lane), lambda i: (i, 0))],
            out_specs=pl.BlockSpec((block_rows, lane), lambda i: (i, 0)),
            compiler_params=pltpu.CompilerParams(
                dimension_semantics=("parallel",),   # shards across v7x's 2 TCs
                vmem_limit_bytes=_VMEM_LIMIT_BYTES),
        )(x2d)
        return out2d.reshape(-1)

    # total is not a multiple of 128 (ragged flat size).
    if total * itemsize <= _TARGET_BLOCK_BYTES:
        # Small odd-sized tensor: one block equal to the full array extent
        # (always legal, comfortably fits VMEM).
        return pl.pallas_call(
            _identity_copy_kernel,
            out_shape=jax.ShapeDtypeStruct((total,), dtype),
            in_specs=[pl.BlockSpec((total,), lambda: (0,))],
            out_specs=pl.BlockSpec((total,), lambda: (0,)),
            compiler_params=pltpu.CompilerParams(
                vmem_limit_bytes=_VMEM_LIMIT_BYTES),
        )(flat)

    # Large odd-sized tensor: tile with a 1-D cdiv grid; the ragged last block
    # is handled by Pallas boundary masking (OOB reads padded, writes dropped).
    block = max(
        sub_mult * 128,
        (_TARGET_BLOCK_BYTES // itemsize) // (sub_mult * 128) * (sub_mult * 128),
    )
    grid = (pl.cdiv(total, block),)
    return pl.pallas_call(
        _identity_copy_kernel,
        out_shape=jax.ShapeDtypeStruct((total,), dtype),
        grid=grid,
        in_specs=[pl.BlockSpec((block,), lambda i: (i,))],
        out_specs=pl.BlockSpec((block,), lambda i: (i,)),
        compiler_params=pltpu.CompilerParams(
            dimension_semantics=("parallel",),
            vmem_limit_bytes=_VMEM_LIMIT_BYTES),
    )(flat)


def pallas_reshape(x, target_shape):
    """Equivalent of Torch7 nn.Reshape / x.view(target_shape)."""
    total = x.size
    target_shape = _resolve_shape(target_shape, total)
    if total == 0:
        return jnp.reshape(x, target_shape)
    flat = x.reshape(-1)            # metadata-only on a contiguous input
    flat_out = _flat_copy(flat)     # hot path: HBM->VMEM->HBM streaming copy
    return flat_out.reshape(target_shape)   # metadata-only


if __name__ == "__main__":
    key = jax.random.PRNGKey(0)
    # Input mirrors a small NCHW conv activation: (2, 4, 16, 16).
    x = jax.random.normal(key, (2, 4, 16, 16), dtype=jnp.float32)

    # nn.Reshape((2, 4, 256)): merge the spatial dims.
    target_shape = (2, 4, 256)
    out = jax.block_until_ready(pallas_reshape(x, target_shape))
    ref = jnp.reshape(x, target_shape)
    assert out.shape == ref.shape, (out.shape, ref.shape)
    assert out.dtype == ref.dtype
    assert bool(jnp.array_equal(out, ref))

    # -1 path on an odd-sized (non-128-divisible) tensor -> ragged fallback.
    y = jax.random.normal(jax.random.PRNGKey(1), (3, 5, 7), dtype=jnp.float32)
    out2 = jax.block_until_ready(pallas_reshape(y, (-1, 7)))
    assert bool(jnp.array_equal(out2, jnp.reshape(y, (-1, 7))))

    # bf16 path exercises the dtype-aware sublane packing.
    z = jax.random.normal(jax.random.PRNGKey(2), (8, 16, 16), dtype=jnp.bfloat16)
    out3 = jax.block_until_ready(pallas_reshape(z, (8, 256)))
    assert bool(jnp.array_equal(out3, jnp.reshape(z, (8, 256))))

    print("KERNEL_OK")
</pallas_src>

<mosaic_0001>
module attributes {stable_mosaic.version = 11 : i64} {
  func.func @_identity_copy_kernel(%arg0: i32, %arg1: memref<2x1024xf32, #tpu.memory_space<vmem>>, %arg2: memref<2x1024xf32, #tpu.memory_space<vmem>>) attributes {dimension_semantics = [#tpu.dimension_semantics<parallel>], iteration_bounds = array<i64: 1>, scalar_prefetch = 0 : i64, scratch_operands = 0 : i64, tpu.core_type = #tpu.core_type<tc>, window_params = [{transform_indices = @transform_0, window_bounds = array<i64: 2, 1024>}, {transform_indices = @transform_1, window_bounds = array<i64: 2, 1024>}]} {
    %c0 = arith.constant 0 : index
    %c0_0 = arith.constant 0 : index
    %0 = vector.load %arg1[%c0, %c0_0] : memref<2x1024xf32, #tpu.memory_space<vmem>>, vector<2x1024xf32>
    %c0_1 = arith.constant 0 : index
    %c0_2 = arith.constant 0 : index
    %1 = vector.load %arg2[%c0_1, %c0_2] : memref<2x1024xf32, #tpu.memory_space<vmem>>, vector<2x1024xf32>
    tpu.vector_store %arg2[%c0_1, %c0_2], %0 {strides = array<i32>} : memref<2x1024xf32, #tpu.memory_space<vmem>>, vector<2x1024xf32>,
    return
  }
  func.func @transform_0(%arg0: i32) -> (i32, i32) {
    %c0_i32 = arith.constant 0 : i32
    %c0_i32_0 = arith.constant 0 : i32
    return %arg0, %c0_i32 : i32, i32
  }
  func.func @transform_1(%arg0: i32) -> (i32, i32) {
    %c0_i32 = arith.constant 0 : i32
    %c0_i32_0 = arith.constant 0 : i32
    return %arg0, %c0_i32 : i32, i32
  }
}

</mosaic_0001>

<llo_original>
// kernel: tpu_custom_call.1
$region0: #{tpu_custom_call.1}
  #allocation0 [shape = 'u32[]', space=smem, size = 0x4, offset = 0x4, fixed_abs, tag = 'smem constant byte address 0x4 - core index']
  #allocation1 [shape = 'u32[72,128]{1,0:T(1,128)}', space=vmem, size = 0x9000, scoped, tag = 'internal scratch']
  %s0 = inlined_call_operand.hbm [shape: f32[2,1024], index: 0, kind: input, shape index: {}]
  %s1 = inlined_call_operand.hbm [shape: f32[2,1024], index: 1, kind: output, shape index: {}]
  %s2 = sld [smem:[#allocation0]]
  $region18: #{tpu_custom_call.1} parent=0
    _
  %s4 = ssub.s32 1, %s2
  %s5 = scalar_select 0, %s4, %s2
  $region1: #{tpu_custom_call.1} parent=0
    #allocation2 [shape = 'u8[8192]{0}', space=vmem, size = 0x2000, scoped, tag = 'input window, operand 0, single buffered']
    #allocation3 [shape = 's32[1]{0}', space=sflag, size = 0x4, scoped, tag = 'scoped memory for tpu_custom_call.1']
    #allocation4 [shape = 's32[1]{0}', space=sflag, size = 0x4, scoped, tag = 'scoped memory for tpu_custom_call.1']
    #allocation5 [shape = 'u8[8192]{0}', space=vmem, size = 0x2000, scoped, tag = 'output window, operand 0, single buffered']
    %6 = vsyncpa [#allocation3], 0
    %7 = vsyncpa [#allocation4], 0
    // Predicated region
    $region2: #{tpu_custom_call.1} parent=1 // pred_check
      _
    $region3: #{tpu_custom_call.1} parent=1 // pred_check_branch
      %9 = sbr.rel (0) target = $region5
    $region4: #{tpu_custom_call.1} parent=1 // pred_region
      %11 = vsyncadd [#allocation3], 0
      %s13 = sshll.u32 %s0, 4
      %s14 = int_to_ptr.hbm [resolvable:$true] %s13
      %s15 = sshll.u32 [#allocation2], 4
      %s16 = int_to_ptr.vmem [resolvable:$true] %s15
      %18 = dma.hbm_to_vmem [thread:$0]  %s14, 256, %s16, [#allocation3]
    $region5: #{tpu_custom_call.1} parent=1 // pred_fallthru
      _
    // Predicated region
    $region6: #{tpu_custom_call.1} parent=1 // pred_check
      _
    $region7: #{tpu_custom_call.1} parent=1 // pred_check_branch
      %20 = sbr.rel (0) target = $region9
    $region8: #{tpu_custom_call.1} parent=1 // pred_region
      %22 = dma.done [#allocation3], 256
    $region9: #{tpu_custom_call.1} parent=1 // pred_fallthru
      _
    %v23 = vld [vmem:[#allocation2] sm:$0xff]
    %v24 = vld [vmem:[#allocation2 + $0x8] sm:$0xff]
    %25 = vst [vmem:[#allocation5] sm:$0xff] %v23
    %26 = vst [vmem:[#allocation5 + $0x8] sm:$0xff] %v24
    // Predicated region
    $region10: #{tpu_custom_call.1} parent=1 // pred_check
      _
    $region11: #{tpu_custom_call.1} parent=1 // pred_check_branch
      %28 = sbr.rel (0) target = $region13
    $region12: #{tpu_custom_call.1} parent=1 // pred_region
      %30 = vsyncadd [#allocation4], 0
      %s32 = sshll.u32 [#allocation5], 4
      %s33 = int_to_ptr.vmem [resolvable:$true] %s32
      %s34 = sshll.u32 %s1, 4
      %s35 = int_to_ptr.hbm [resolvable:$true] %s34
      %37 = dma.vmem_to_hbm [thread:$0]  %s33, 256, %s35, [#allocation4]
    $region13: #{tpu_custom_call.1} parent=1 // pred_fallthru
      _
    // Predicated region
    $region14: #{tpu_custom_call.1} parent=1 // pred_check
      _
    $region15: #{tpu_custom_call.1} parent=1 // pred_check_branch
      %39 = sbr.rel (0) target = $region17
    $region16: #{tpu_custom_call.1} parent=1 // pred_region
      %41 = dma.done [#allocation4], 256
    $region17: #{tpu_custom_call.1} parent=1 // pred_fallthru
      _
    %42 = vsyncpa [#allocation3], 1
    %43 = vsyncpa [#allocation4], 1

</llo_original>
